<compile_context>
chip_gen: v7x
topology: tpu7x:2x2x1
jax: 0.10.0
libtpu: 0.0.40
codegen_flags: <defaults>
</compile_context>

<pallas_src>
import math
import functools

import jax
import jax.numpy as jnp
from jax import lax
from jax.experimental import pallas as pl
from jax.experimental.pallas import tpu as pltpu


def _round_up(x, m):
    return ((x + m - 1) // m) * m


# ---------------------------------------------------------------------------
# Kernel: out(M,N) = x(M,K) @ W(N,K)^T + bias(1,N), K reduced over grid axis 2.
# The output block index is constant along k, so o_ref stays VMEM-resident
# across the whole reduction: accumulate straight into it, no scratch.
# ---------------------------------------------------------------------------
def trace_matmul_kernel(x_ref, w_ref, b_ref, o_ref):
    k = pl.program_id(2)

    @pl.when(k == 0)
    def _init():
        # Initialize the resident output tile with the (broadcast) bias.
        o_ref[...] = jnp.broadcast_to(b_ref[...], o_ref.shape)

    # x @ W^T: contract K (dim 1 of both operands) on the MXU, f32 accumulate.
    o_ref[...] += lax.dot_general(
        x_ref[...], w_ref[...],
        dimension_numbers=(((1,), (1,)), ((), ())),
        preferred_element_type=jnp.float32)


# ---------------------------------------------------------------------------
# Tile / VMEM planning
# ---------------------------------------------------------------------------
def _vmem_limit_bytes():
    phys = None
    try:
        phys = pltpu.get_tpu_info().vmem_capacity_bytes
    except Exception:
        phys = None
    if not phys:
        phys = 64 * 1024 * 1024  # conservative default (v7x per-TC VMEM)
    # Leave headroom for Mosaic internal scratch; cap at ~100 MiB (v5e/v6e).
    return int(max(32 * 1024 * 1024, min(phys - 16 * 1024 * 1024,
                                         100 * 1024 * 1024)))


def _plan_tiles(B, N, K, *, tm_cap=1024, tn_cap=2048, tk_cap=2048):
    """Pick (tm, tn, tk) as large as the per-generation VMEM budget allows."""
    vmem_limit = _vmem_limit_bytes()
    budget = int(0.6 * vmem_limit)

    M8 = _round_up(B, 8)
    N128 = _round_up(N, 128)
    K128 = _round_up(K, 128)

    tm = min(M8, tm_cap)
    tn = min(N128, tn_cap)
    tk = min(K128, tk_cap)

    def footprint(tm_, tn_, tk_):
        return (2 * tm_ * tk_ * 2      # x   bf16, double-buffered
                + 2 * tn_ * tk_ * 2    # W   bf16, double-buffered
                + 2 * tn_ * 4          # bias f32
                + 2 * tm_ * tn_ * 4)   # out / accumulator f32

    # Greedily shrink the largest tile dim until the working set fits.
    while footprint(tm, tn, tk) > budget:
        if tk >= tn and tk >= tm and tk > 128:
            tk = max(128, _round_up(tk // 2, 128))
        elif tn >= tm and tn > 128:
            tn = max(128, _round_up(tn // 2, 128))
        elif tm > 8:
            tm = max(8, _round_up(tm // 2, 8))
        else:
            break

    # Keep the megacore 'parallel' grid non-degenerate when possible (v7x has
    # two TensorCores; a 1x1 parallel grid leaves one idle).
    if (M8 // tm) <= 1 and (N128 // tn) <= 1 and N128 >= 256:
        tn = _round_up(max(128, N128 // 2), 128)

    M_pad = _round_up(B, tm)
    N_pad = _round_up(N, tn)
    K_pad = _round_up(K, tk)
    return dict(tm=tm, tn=tn, tk=tk,
                M_pad=M_pad, N_pad=N_pad, K_pad=K_pad,
                vmem_limit=vmem_limit)


# ---------------------------------------------------------------------------
# Parameter prep (do once, reuse across forward calls) + forward
# ---------------------------------------------------------------------------
def prepare_params(weight, bias, batch_size, **tile_kwargs):
    """One-time conversion of TraceLayer params into kernel layout.

    Returns (w_flat_bf16_padded, b_flat_f32_padded, plan).  Reusing the result
    across forward calls removes the per-call f32->bf16 cast + pad HBM pass
    over the weight matrix.
    """
    O0, O1, I0, I1 = weight.shape
    N, K = O0 * O1, I0 * I1
    plan = _plan_tiles(batch_size, N, K, **tile_kwargs)
    plan.update(B=batch_size, N=N, K=K, O0=O0, O1=O1)

    w_flat = weight.reshape(N, K).astype(jnp.bfloat16)
    b_flat = bias.reshape(1, N).astype(jnp.float32)
    if (plan["N_pad"], plan["K_pad"]) != (N, K):
        w_flat = jnp.pad(w_flat, ((0, plan["N_pad"] - N),
                                  (0, plan["K_pad"] - K)))
    if plan["N_pad"] != N:
        b_flat = jnp.pad(b_flat, ((0, 0), (0, plan["N_pad"] - N)))
    return w_flat, b_flat, plan


def trace_layer_apply(x, w_flat, b_flat, plan):
    """x: (B, I0, I1) f32 -> (B, O0, O1) f32, using prepared params."""
    B = x.shape[0]
    assert B == plan["B"], "batch size must match the prepared plan"
    N, K = plan["N"], plan["K"]
    tm, tn, tk = plan["tm"], plan["tn"], plan["tk"]
    M_pad, N_pad, K_pad = plan["M_pad"], plan["N_pad"], plan["K_pad"]

    x_flat = x.reshape(B, K).astype(jnp.bfloat16)
    if (M_pad, K_pad) != (B, K):
        x_flat = jnp.pad(x_flat, ((0, M_pad - B), (0, K_pad - K)))

    grid = (M_pad // tm, N_pad // tn, K_pad // tk)
    gi, gj, gk = grid

    cost = pl.CostEstimate(
        flops=2 * M_pad * N_pad * K_pad,
        transcendentals=0,
        # x is re-streamed once per N tile, W once per M tile.
        bytes_accessed=(x_flat.size * 2 * gj + w_flat.size * 2 * gi
                        + b_flat.size * 4 * gi + M_pad * N_pad * 4))

    out_pad = pl.pallas_call(
        trace_matmul_kernel,
        out_shape=jax.ShapeDtypeStruct((M_pad, N_pad), jnp.float32),
        grid_spec=pltpu.PrefetchScalarGridSpec(
            num_scalar_prefetch=0,
            grid=grid,
            in_specs=[
                pl.BlockSpec((tm, tk), lambda i, j, k: (i, k)),   # x    (M, K)
                pl.BlockSpec((tn, tk), lambda i, j, k: (j, k)),   # W    (N, K)
                pl.BlockSpec((1, tn), lambda i, j, k: (0, j)),    # bias (1, N)
            ],
            out_specs=pl.BlockSpec((tm, tn), lambda i, j, k: (i, j)),
        ),
        compiler_params=pltpu.CompilerParams(
            dimension_semantics=("parallel", "parallel", "arbitrary"),
            vmem_limit_bytes=plan["vmem_limit"],
        ),
        cost_estimate=cost,
    )(x_flat, w_flat, b_flat)

    return out_pad[:B, :N].reshape(B, plan["O0"], plan["O1"])


def trace_layer_forward(x, weight, bias):
    """Convenience one-shot path (prepares params every call)."""
    w_flat, b_flat, plan = prepare_params(weight, bias, x.shape[0])
    return trace_layer_apply(x, w_flat, b_flat, plan)


def init_params(key, input_shape, output_shape):
    """Deterministic init mirroring PyTorch reset_parameters()."""
    I0, I1 = input_shape
    O0, O1 = output_shape
    k_w, k_b = jax.random.split(key)
    # kaiming_uniform_(a=sqrt(5)) on a 4D tensor => bound = 1/sqrt(fan_in),
    # fan_in = shape[1]*shape[2]*shape[3] = O1*I0*I1
    fan_in = O1 * I0 * I1
    bound = 1.0 / math.sqrt(fan_in)
    weight = jax.random.uniform(
        k_w, (O0, O1, I0, I1), jnp.float32, minval=-bound, maxval=bound)
    bias = jax.random.uniform(
        k_b, (O0, O1), jnp.float32, minval=-bound, maxval=bound)
    return weight, bias


if __name__ == "__main__":
    key = jax.random.PRNGKey(0)
    k_x, k_p, k_x2, k_p2 = jax.random.split(key, 4)

    def ref(w, b, xv):
        return jnp.einsum("oqij,bij->boq", w, xv,
                          precision=lax.Precision.HIGHEST) + b

    # --- test 1: small shapes, cached-weight path under jit -----------------
    input_shape, output_shape, B = (4, 8), (4, 8), 2
    weight, bias = init_params(k_p, input_shape, output_shape)
    x = jax.random.normal(k_x, (B,) + input_shape, jnp.float32)

    w_flat, b_flat, plan = prepare_params(weight, bias, B)   # one-time prep
    apply_fn = jax.jit(functools.partial(trace_layer_apply, plan=plan))
    out = jax.block_until_ready(apply_fn(x, w_flat, b_flat))
    assert out.shape == (B,) + output_shape

    # Match the kernel's operand precision (bf16 operands, f32 accumulate).
    ref_bf16 = ref(weight.astype(jnp.bfloat16).astype(jnp.float32), bias,
                   x.astype(jnp.bfloat16).astype(jnp.float32))
    assert jnp.allclose(out, ref_bf16, atol=1e-4, rtol=1e-4)
    # Full-precision reference: loose tolerance covers the bf16 operand cast.
    assert jnp.allclose(out, ref(weight, bias, x), atol=5e-2, rtol=5e-2)

    # --- test 2: forced small tiles -> multi-step K reduction + N sweep -----
    input_shape2, output_shape2, B2 = (16, 16), (16, 16), 5
    weight2, bias2 = init_params(k_p2, input_shape2, output_shape2)
    x2 = jax.random.normal(k_x2, (B2,) + input_shape2, jnp.float32)
    w2, b2, plan2 = prepare_params(weight2, bias2, B2,
                                   tm_cap=8, tn_cap=128, tk_cap=128)
    out2 = jax.block_until_ready(trace_layer_apply(x2, w2, b2, plan2))
    assert out2.shape == (B2,) + output_shape2
    assert jnp.allclose(out2, ref(weight2, bias2, x2), atol=5e-2, rtol=5e-2)

    print("KERNEL_OK")
</pallas_src>

<mosaic_0001>
module attributes {stable_mosaic.version = 11 : i64} {
  func.func @trace_matmul_kernel(%arg0: i32, %arg1: i32, %arg2: i32, %arg3: memref<8x128xbf16, #tpu.memory_space<vmem>>, %arg4: memref<128x128xbf16, #tpu.memory_space<vmem>>, %arg5: memref<1x128xf32, #tpu.memory_space<vmem>>, %arg6: memref<8x128xf32, #tpu.memory_space<vmem>>) attributes {dimension_semantics = [#tpu.dimension_semantics<parallel>, #tpu.dimension_semantics<parallel>, #tpu.dimension_semantics<arbitrary>], iteration_bounds = array<i64: 1, 1, 1>, scalar_prefetch = 0 : i64, scratch_operands = 0 : i64, tpu.core_type = #tpu.core_type<tc>, window_params = [{transform_indices = @transform_0, window_bounds = array<i64: 8, 128>}, {transform_indices = @transform_1, window_bounds = array<i64: 128, 128>}, {transform_indices = @transform_2, window_bounds = array<i64: 1, 128>}, {transform_indices = @transform_3, window_bounds = array<i64: 8, 128>}]} {
    %c0_i32 = arith.constant 0 : i32
    %0 = arith.cmpi eq, %arg2, %c0_i32 : i32
    %1 = arith.extui %0 : i1 to i32
    %c0_i32_0 = arith.constant 0 : i32
    %2 = arith.cmpi ne, %1, %c0_i32_0 : i32
    scf.if %2 {
      %c0_8 = arith.constant 0 : index
      %c0_9 = arith.constant 0 : index
      %9 = vector.load %arg5[%c0_8, %c0_9] : memref<1x128xf32, #tpu.memory_space<vmem>>, vector<1x128xf32>
      %10 = vector.shape_cast %9 : vector<1x128xf32> to vector<1x128xf32>
      %11 = vector.broadcast %10 : vector<1x128xf32> to vector<8x128xf32>
      %c0_10 = arith.constant 0 : index
      %c0_11 = arith.constant 0 : index
      %12 = vector.load %arg6[%c0_10, %c0_11] : memref<8x128xf32, #tpu.memory_space<vmem>>, vector<8x128xf32>
      tpu.vector_store %arg6[%c0_10, %c0_11], %11 {strides = array<i32>} : memref<8x128xf32, #tpu.memory_space<vmem>>, vector<8x128xf32>,
    } else {
    }
    %c0 = arith.constant 0 : index
    %c0_1 = arith.constant 0 : index
    %3 = vector.load %arg6[%c0, %c0_1] : memref<8x128xf32, #tpu.memory_space<vmem>>, vector<8x128xf32>
    %c0_2 = arith.constant 0 : index
    %c0_3 = arith.constant 0 : index
    %4 = vector.load %arg3[%c0_2, %c0_3] : memref<8x128xbf16, #tpu.memory_space<vmem>>, vector<8x128xbf16>
    %c0_4 = arith.constant 0 : index
    %c0_5 = arith.constant 0 : index
    %5 = vector.load %arg4[%c0_4, %c0_5] : memref<128x128xbf16, #tpu.memory_space<vmem>>, vector<128x128xbf16>
    %cst = arith.constant dense<0.000000e+00> : vector<8x128xf32>
    %6 = tpu.matmul %4, %5, %cst {dimension_numbers = #tpu.dot_dimension_numbers<[1], [1], [0], [0], [0, 0, 1, 0], [], []>} : vector<8x128xbf16>, vector<128x128xbf16>, vector<8x128xf32> -> vector<8x128xf32>
    %7 = arith.addf %3, %6 : vector<8x128xf32>
    %c0_6 = arith.constant 0 : index
    %c0_7 = arith.constant 0 : index
    %8 = vector.load %arg6[%c0_6, %c0_7] : memref<8x128xf32, #tpu.memory_space<vmem>>, vector<8x128xf32>
    tpu.vector_store %arg6[%c0_6, %c0_7], %7 {strides = array<i32>} : memref<8x128xf32, #tpu.memory_space<vmem>>, vector<8x128xf32>,
    return
  }
  func.func @transform_0(%arg0: i32, %arg1: i32, %arg2: i32) -> (i32, i32) {
    %c0_i32 = arith.constant 0 : i32
    return %arg0, %arg2 : i32, i32
  }
  func.func @transform_1(%arg0: i32, %arg1: i32, %arg2: i32) -> (i32, i32) {
    %c0_i32 = arith.constant 0 : i32
    return %arg1, %arg2 : i32, i32
  }
  func.func @transform_2(%arg0: i32, %arg1: i32, %arg2: i32) -> (i32, i32) {
    %c0_i32 = arith.constant 0 : i32
    %c0_i32_0 = arith.constant 0 : i32
    return %c0_i32, %arg1 : i32, i32
  }
  func.func @transform_3(%arg0: i32, %arg1: i32, %arg2: i32) -> (i32, i32) {
    %c0_i32 = arith.constant 0 : i32
    return %arg0, %arg1 : i32, i32
  }
}

</mosaic_0001>

<llo_original>
// kernel: trace_layer_apply.1
$region0: #{trace_layer_apply.1}
  #allocation0 [shape = 'u32[]', space=smem, size = 0x4, offset = 0x4, fixed_abs, tag = 'smem constant byte address 0x4 - core index']
  #allocation1 [shape = 'u32[144,128]{1,0:T(1,128)}', space=vmem, size = 0x12000, scoped, tag = 'internal scratch']
  %s0 = inlined_call_operand.vmem [shape: bf16[8,128], index: 0, kind: input, shape index: {}]
  %s1 = inlined_call_operand.hbm [shape: bf16[128,128], index: 1, kind: input, shape index: {}]
  %s2 = inlined_call_operand.vmem [shape: f32[1,128], index: 2, kind: input, shape index: {}]
  %s3 = inlined_call_operand.vmem [shape: f32[8,128], index: 3, kind: output, shape index: {}]
  %s4 = sld [smem:[#allocation0]]
  $region30: #{trace_layer_apply.1} parent=0
    _
  %s6 = ssub.s32 1, %s4
  %s7 = scalar_select 0, %s6, %s4
  $region1: #{trace_layer_apply.1} parent=0
    #allocation2 [shape = 'u8[32768]{0}', space=vmem, size = 0x8000, scoped, tag = 'input window, operand 1, single buffered']
    #allocation3 [shape = 's32[1]{0}', space=sflag, size = 0x4, scoped, tag = 'scoped memory for trace_layer_apply.1']
    %8 = vsyncpa [#allocation3], 0
    // Predicated region
    $region2: #{trace_layer_apply.1} parent=1 // pred_check
      _
    $region3: #{trace_layer_apply.1} parent=1 // pred_check_branch
      %10 = sbr.rel (0) target = $region5
    $region4: #{trace_layer_apply.1} parent=1 // pred_region
      _
    $region5: #{trace_layer_apply.1} parent=1 // pred_fallthru
      _
    // Predicated region
    $region6: #{trace_layer_apply.1} parent=1 // pred_check
      _
    $region7: #{trace_layer_apply.1} parent=1 // pred_check_branch
      %12 = sbr.rel (0) target = $region9
    $region8: #{trace_layer_apply.1} parent=1 // pred_region
      %s14 = ssub.s32 1024, 1024
      %15 = vsyncadd [#allocation3], %s14
      %s16 = sshll.u32 [#allocation2], 4
      %s17 = int_to_ptr.vmem [resolvable:$true] %s16
      %22 = dma.hbm_to_vmem [thread:$0]  %s1, 1024, %s17, [#allocation3], 64, 64, 4
    $region9: #{trace_layer_apply.1} parent=1 // pred_fallthru
      _
    // Predicated region
    $region10: #{trace_layer_apply.1} parent=1 // pred_check
      _
    $region11: #{trace_layer_apply.1} parent=1 // pred_check_branch
      %24 = sbr.rel (0) target = $region13
    $region12: #{trace_layer_apply.1} parent=1 // pred_region
      _
    $region13: #{trace_layer_apply.1} parent=1 // pred_fallthru
      _
    // Predicated region
    $region14: #{trace_layer_apply.1} parent=1 // pred_check
      _
    $region15: #{trace_layer_apply.1} parent=1 // pred_check_branch
      %26 = sbr.rel (0) target = $region17
    $region16: #{trace_layer_apply.1} parent=1 // pred_region
      %27 = dma.done [#allocation3], 1024
    $region17: #{trace_layer_apply.1} parent=1 // pred_fallthru
      _
    %p29 = scmp.eq.s32.totalorder 0, 0
    // Predicated region
    $region18: #{trace_layer_apply.1} parent=1 // pred_check
      %p30 = pneg %p29
    $region19: #{trace_layer_apply.1} parent=1 // pred_check_branch
      %32 = sbr.rel (%p30) target = $region21
    $region20: #{trace_layer_apply.1} parent=1 // pred_region
      %v33 = vld [vmem:[%s2] sm:$0x1]
      %v35 = vlaneseq
      %v36 = vshrl.u32 %v35, 7
      %v37 = vsub.s32 0, %v36
      %v38 = vrot.slane %v33, %v37
      %40 = vst [vmem:[%s3] sm:$0xff] %v38
    $region21: #{trace_layer_apply.1} parent=1 // pred_fallthru
      _
    %v41 = vld [vmem:[%s3] sm:$0xff]
    %v42 = vld [vmem:[%s0] sm:$0xf]
    %v43 = vld [vmem:[#allocation2] sm:$0xf]
    %v44 = vld [vmem:[#allocation2 + $0x4] sm:$0xf]
    %v45 = vld [vmem:[#allocation2 + $0x8] sm:$0xf]
    %v46 = vld [vmem:[#allocation2 + $0xc] sm:$0xf]
    %v47 = vld [vmem:[#allocation2 + $0x10] sm:$0xf]
    %v48 = vld [vmem:[#allocation2 + $0x14] sm:$0xf]
    %v49 = vld [vmem:[#allocation2 + $0x18] sm:$0xf]
    %v50 = vld [vmem:[#allocation2 + $0x1c] sm:$0xf]
    %v51 = vld [vmem:[#allocation2 + $0x20] sm:$0xf]
    %v52 = vld [vmem:[#allocation2 + $0x24] sm:$0xf]
    %v53 = vld [vmem:[#allocation2 + $0x28] sm:$0xf]
    %v54 = vld [vmem:[#allocation2 + $0x2c] sm:$0xf]
    %v55 = vld [vmem:[#allocation2 + $0x30] sm:$0xf]
    %v56 = vld [vmem:[#allocation2 + $0x34] sm:$0xf]
    %v57 = vld [vmem:[#allocation2 + $0x38] sm:$0xf]
    %v58 = vld [vmem:[#allocation2 + $0x3c] sm:$0xf]
    %v75 = vunpack.c.l.b16 %v43
    %v76 = vunpack.c.l.b16 %v44
    %v77 = vunpack.c.l.b16 %v45
    %v78 = vunpack.c.l.b16 %v46
    %v79 = vunpack.c.l.b16 %v47
    %v80 = vunpack.c.l.b16 %v48
    %v81 = vunpack.c.l.b16 %v49
    %v82 = vunpack.c.l.b16 %v50
    %v83 = vunpack.c.l.b16 %v51
    %v84 = vunpack.c.l.b16 %v52
    %v85 = vunpack.c.l.b16 %v53
    %v86 = vunpack.c.l.b16 %v54
    %v87 = vunpack.c.l.b16 %v55
    %v88 = vunpack.c.l.b16 %v56
    %v89 = vunpack.c.l.b16 %v57
    %v90 = vunpack.c.l.b16 %v58
    %v91 = vpack.c.b16 %v76, %v75
    %v92 = vpack.c.b16 %v78, %v77
    %v93 = vpack.c.b16 %v80, %v79
    %v94 = vpack.c.b16 %v82, %v81
    %v95 = vpack.c.b16 %v84, %v83
    %v96 = vpack.c.b16 %v86, %v85
    %v97 = vpack.c.b16 %v88, %v87
    %v98 = vpack.c.b16 %v90, %v89
    %107 = vmatprep.subr.bf16.mxu0 0
    %108 = vmatpush1.bf16.xpose.msra.mxu0 %v91
    %109 = vmatprep.subr.bf16.mxu0 0
    %110 = vmatpush1.bf16.xpose.msra.mxu0 %v92
    %111 = vmatprep.subr.bf16.mxu0 0
    %112 = vmatpush1.bf16.xpose.msra.mxu0 %v93
    %113 = vmatprep.subr.bf16.mxu0 0
    %114 = vmatpush1.bf16.xpose.msra.mxu0 %v94
    %115 = vmatprep.subr.bf16.mxu0 0
    %116 = vmatpush1.bf16.xpose.msra.mxu0 %v95
    %117 = vmatprep.subr.bf16.mxu0 0
    %118 = vmatpush1.bf16.xpose.msra.mxu0 %v96
    %119 = vmatprep.subr.bf16.mxu0 0
    %120 = vmatpush1.bf16.xpose.msra.mxu0 %v97
    %121 = vmatprep.subr.bf16.mxu0 0
    %122 = vmatpush1.bf16.xpose.msra.mxu0 %v98
    %123 = vmatprep.subr.bf16.mxu0 0
    %124 = vmatpush1.bf16.xpose.msra.mxu0 0
    %125 = vmatprep.subr.bf16.mxu0 0
    %126 = vmatpush1.bf16.xpose.msra.mxu0 0
    %127 = vmatprep.subr.bf16.mxu0 0
    %128 = vmatpush1.bf16.xpose.msra.mxu0 0
    %129 = vmatprep.subr.bf16.mxu0 0
    %130 = vmatpush1.bf16.xpose.msra.mxu0 0
    %131 = vmatprep.subr.bf16.mxu0 0
    %132 = vmatpush1.bf16.xpose.msra.mxu0 0
    %133 = vmatprep.subr.bf16.mxu0 0
    %134 = vmatpush1.bf16.xpose.msra.mxu0 0
    %135 = vmatprep.subr.bf16.mxu0 0
    %136 = vmatpush1.bf16.xpose.msra.mxu0 0
    %137 = vmatprep.subr.bf16.mxu0 0
    %138 = vmatpush1.bf16.xpose.msra.mxu0 0
    %139 = vmatprep.mubr.bf16.mxu0 0
    %140 = vmatmul.mubr.bf16.gmra.mrb[0].mxu0 %v42
    %v141 = vpop.f32.mrb[0].mxu0
    %v142 = vadd.f32 0.0, %v141
    %v143 = vpop.f32.mrb[0].mxu0
    %v144 = vpop.f32.mrb[0].mxu0
    %v145 = vpop.f32.mrb[0].mxu0
    %146 = vdwg.mxu0
    %v147 = vadd.f32 %v41, %v142
    %148 = vst [vmem:[%s3] sm:$0xff] %v147
    // Predicated region
    $region22: #{trace_layer_apply.1} parent=1 // pred_check
      _
    $region23: #{trace_layer_apply.1} parent=1 // pred_check_branch
      %150 = sbr.rel (0) target = $region25
    $region24: #{trace_layer_apply.1} parent=1 // pred_region
      _
    $region25: #{trace_layer_apply.1} parent=1 // pred_fallthru
      _
    // Predicated region
    $region26: #{trace_layer_apply.1} parent=1 // pred_check
      _
    $region27: #{trace_layer_apply.1} parent=1 // pred_check_branch
      %152 = sbr.rel (0) target = $region29
    $region28: #{trace_layer_apply.1} parent=1 // pred_region
      _
    $region29: #{trace_layer_apply.1} parent=1 // pred_fallthru
      _
    %153 = vsyncpa [#allocation3], 1

</llo_original>
